<compile_context>
chip_gen: v7x
topology: tpu7x:2x2x1
jax: 0.10.0
libtpu: 0.0.40
codegen_flags: <defaults>
</compile_context>

<pallas_src>
import math
from functools import partial

import jax
import jax.numpy as jnp
from jax.experimental import pallas as pl
from jax.experimental.pallas import tpu as pltpu


_MIB = 1024 * 1024
_TK_MAX = 8192     # favor gk == 1 (no accumulator scratch, fewer K steps)
_TN_MAX = 512      # lane-aligned, safe against v7x's 64 MiB VMEM
_TM_MAX = 8192     # keep a few grid steps so DMA overlaps compute


def _vmem_capacity_bytes():
    """Physical VMEM per core; conservative 64 MiB (v7x) fallback."""
    try:
        cap = getattr(pltpu.get_tpu_info(), "vmem_capacity_bytes", None)
        if cap:
            return int(cap)
    except Exception:
        pass
    return 64 * _MIB


# ----------------------------- Pallas kernels ------------------------------ #

def _matmul_lrelu_kernel_noacc(a_ref, b_ref, o_ref, *, apply_lrelu,
                               negative_slope):
    """Single K-block: compute, fuse LeakyReLU, write directly (no scratch)."""
    y = jnp.dot(a_ref[...], b_ref[...], preferred_element_type=jnp.float32)
    if apply_lrelu:
        y = jnp.where(y >= 0.0, y, negative_slope * y)
    o_ref[...] = y.astype(o_ref.dtype)


def _matmul_lrelu_kernel_acc(a_ref, b_ref, o_ref, acc_ref, *, apply_lrelu,
                             negative_slope):
    """K is blocked: accumulate in f32 VMEM scratch, epilogue on last K step."""
    @pl.when(pl.program_id(2) == 0)
    def _():
        acc_ref[...] = jnp.zeros_like(acc_ref)

    acc_ref[...] += jnp.dot(a_ref[...], b_ref[...],
                            preferred_element_type=jnp.float32)

    @pl.when(pl.program_id(2) == pl.num_programs(2) - 1)
    def _():
        y = acc_ref[...]
        if apply_lrelu:
            y = jnp.where(y >= 0.0, y, negative_slope * y)
        o_ref[...] = y.astype(o_ref.dtype)


# --------------------------- tile selection logic --------------------------- #

def _largest_aligned_divisor(dim, cap, align):
    """Largest `align`-multiple divisor of dim that is <= cap, else full dim."""
    if dim <= cap:
        return dim                      # full-extent block: no padding needed
    cand = (cap // align) * align
    while cand >= align:
        if dim % cand == 0:
            return cand
        cand -= align
    return dim                          # fallback: single full-extent block


def _select_tiles(M, K, N, out_itemsize, budget):
    """VMEM-budget-driven (tm, Mp, tk, tn).

    tk/tn full-extent when they fit the caps (gk==1 path + weight resident
    across all M steps).  tm is a multiple-of-8 divisor of M sized so the
    double-buffered working set stays within `budget` (no A padding / output
    slicing in the common case)."""
    tk = _largest_aligned_divisor(K, _TK_MAX, 128)
    tn = _largest_aligned_divisor(N, _TN_MAX, 128)
    gk = K // tk

    b_tiles = 2 * tk * tn * 2                      # double-buffered bf16 B
    per_m = 2 * (tk * 2 + tn * out_itemsize)       # dbl-buffered A row + out row
    if gk > 1:
        per_m += tn * 4                            # f32 accumulator scratch
    avail = max(budget - b_tiles, 2 * _MIB)
    tm_cap = int(max(8, min(avail // per_m, _TM_MAX)))

    if M <= tm_cap:
        return M, M, tk, tn                        # full-extent M block
    tm = (tm_cap // 8) * 8
    while tm >= 8:
        if M % tm == 0:
            return tm, M, tk, tn                   # divisor -> no padding
        tm -= 8
    # Rare fallback (no usable multiple-of-8 divisor): pad M.
    tm = max(8, min((tm_cap // 8) * 8, 512))
    Mp = ((M + tm - 1) // tm) * tm
    return tm, Mp, tk, tn


def matmul_lrelu(a, b, *, apply_lrelu, negative_slope=0.2,
                 out_dtype=jnp.float32):
    """a: (M, K) bf16, b: (K, N) bf16 -> (M, N) out_dtype, f32 accumulation."""
    M, K = a.shape
    K2, N = b.shape
    assert K == K2
    out_itemsize = jnp.dtype(out_dtype).itemsize

    cap = _vmem_capacity_bytes()
    budget = min(cap // 2, 48 * _MIB)   # double-buffered working-set budget
    tm, Mp, tk, tn = _select_tiles(M, K, N, out_itemsize, budget)
    if Mp != M:                         # rare fallback path only
        a = jnp.pad(a, ((0, Mp - M), (0, 0)))

    gm, gn, gk = Mp // tm, N // tn, K // tk

    # Per-layer VMEM limit derived from the actual tile bytes (+ headroom).
    working = (2 * tm * tk * 2 + 2 * tk * tn * 2 + 2 * tm * tn * out_itemsize
               + (tm * tn * 4 if gk > 1 else 0))
    vmem_limit = int(min(max(32 * _MIB, working + 4 * _MIB),
                         max(32 * _MIB, cap - 16 * _MIB)))

    cost = pl.CostEstimate(
        flops=2 * M * N * K,
        transcendentals=0,
        bytes_accessed=(M * K * 2 + K * N * 2 + M * N * out_itemsize))
    cparams = pltpu.CompilerParams(
        dimension_semantics=("parallel", "parallel", "arbitrary"),
        vmem_limit_bytes=vmem_limit)

    if gk == 1:
        kernel = partial(_matmul_lrelu_kernel_noacc, apply_lrelu=apply_lrelu,
                         negative_slope=negative_slope)
        scratch = []
    else:
        kernel = partial(_matmul_lrelu_kernel_acc, apply_lrelu=apply_lrelu,
                         negative_slope=negative_slope)
        scratch = [pltpu.VMEM((tm, tn), jnp.float32)]

    out = pl.pallas_call(
        kernel,
        out_shape=jax.ShapeDtypeStruct((Mp, N), out_dtype),
        grid_spec=pltpu.PrefetchScalarGridSpec(
            num_scalar_prefetch=0,
            grid=(gm, gn, gk),
            in_specs=[pl.BlockSpec((tm, tk), lambda i, j, k: (i, k)),
                      pl.BlockSpec((tk, tn), lambda i, j, k: (k, j))],
            out_specs=pl.BlockSpec((tm, tn), lambda i, j, k: (i, j)),
            scratch_shapes=scratch),
        compiler_params=cparams,
        cost_estimate=cost,
    )(a, b)
    return out[:M] if Mp != M else out


# ------------------------------- glue (JAX) -------------------------------- #

def im2col_nhwc(x, kh, kw, stride, pad):
    """x: (N, H, W, C) -> (N*Ho*Wo, kh*kw*C); per-row order (kh, kw, C)."""
    n, h, w, c = x.shape
    if pad > 0:
        x = jnp.pad(x, ((0, 0), (pad, pad), (pad, pad), (0, 0)))
    ho = (h + 2 * pad - kh) // stride + 1
    wo = (w + 2 * pad - kw) // stride + 1
    patches = []
    for i in range(kh):
        for j in range(kw):
            patches.append(x[:, i:i + stride * ho:stride,
                             j:j + stride * wo:stride, :])
    cols = jnp.stack(patches, axis=3)                 # (N, Ho, Wo, kh*kw, C)
    return cols.reshape(n * ho * wo, kh * kw * c), ho, wo


def conv2d_pallas_nhwc(x, w_mat, kh, kw, stride, pad, *, apply_lrelu,
                       out_dtype, negative_slope=0.2):
    """PyTorch-semantics Conv2d (bias=False) on NHWC activations.

    w_mat: (kh*kw*Cin, Cout) bf16, rows ordered (kh, kw, Cin) to match im2col.
    """
    n = x.shape[0]
    cols, ho, wo = im2col_nhwc(x, kh, kw, stride, pad)
    y = matmul_lrelu(cols, w_mat, apply_lrelu=apply_lrelu,
                     negative_slope=negative_slope, out_dtype=out_dtype)
    return y.reshape(n, ho, wo, -1)                   # NHWC


def spectral_normalize(w, n_iter=20, eps=1e-12):
    """Divide w by its largest singular value (converged power iteration).

    PyTorch's spectral_norm does 1 power-iteration step per forward from a
    persistent random u; here we run it to convergence deterministically as a
    one-time parameter preprocessing step (in f32, before the bf16 cast)."""
    w_mat = w.reshape(w.shape[0], -1)
    u = jnp.full((w_mat.shape[0],), 1.0 / jnp.sqrt(w_mat.shape[0]), jnp.float32)
    v = None
    for _ in range(n_iter):
        v = w_mat.T @ u
        v = v / (jnp.linalg.norm(v) + eps)
        u = w_mat @ v
        u = u / (jnp.linalg.norm(u) + eps)
    sigma = u @ (w_mat @ v)
    return w / sigma


# ------------------------------- the module -------------------------------- #

class D:
    """JAX/Pallas port of DCGAN.D. bias_flag=False everywhere, as in PyTorch."""

    def __init__(self, key, output_dim=128, input_dim=3, image_size=128,
                 GDscale=16, Dscale4G=1, hidden_scale=2):
        up_times = math.log(image_size, 2) - 3
        first_hidden_dim = image_size * GDscale // (2 ** int(up_times) * Dscale4G)

        def init_w(k, cout, cin, ks):
            fan_in = cin * ks * ks
            return (jax.random.normal(k, (cout, cin, ks, ks), jnp.float32)
                    / jnp.sqrt(float(fan_in)))

        def pack(w):
            # (Cout, Cin, kh, kw) -> (kh*kw*Cin, Cout) bf16; matches NHWC im2col.
            cout, cin, kh, kw = w.shape
            return (w.transpose(2, 3, 1, 0)
                     .reshape(kh * kw * cin, cout)
                     .astype(jnp.bfloat16))

        self.layers = []  # each: dict(w, kh, kw, stride, pad, lrelu)

        key, sub = jax.random.split(key)
        w = spectral_normalize(init_w(sub, first_hidden_dim, input_dim, 4))
        self.layers.append(dict(w=pack(w), kh=4, kw=4, stride=2, pad=1,
                                lrelu=True))
        hidden_dim = first_hidden_dim
        while up_times > 0:
            key, sub = jax.random.split(key)
            w = spectral_normalize(
                init_w(sub, int(hidden_dim * hidden_scale), hidden_dim, 4))
            self.layers.append(dict(w=pack(w), kh=4, kw=4, stride=2, pad=1,
                                    lrelu=True))
            hidden_dim = hidden_dim * 2
            up_times = up_times - 1
        key, sub = jax.random.split(key)
        w = init_w(sub, output_dim, hidden_dim, 4)      # final conv: no SN
        self.layers.append(dict(w=pack(w), kh=4, kw=4, stride=1, pad=0,
                                lrelu=False))

    def __call__(self, x_nchw):
        # Model-boundary conversion: NCHW (PyTorch) -> NHWC, bf16 for the MXU.
        x = jnp.transpose(x_nchw, (0, 2, 3, 1)).astype(jnp.bfloat16)
        n_layers = len(self.layers)
        for idx, lyr in enumerate(self.layers):
            last = idx == n_layers - 1
            x = conv2d_pallas_nhwc(
                x, lyr["w"], lyr["kh"], lyr["kw"], lyr["stride"], lyr["pad"],
                apply_lrelu=lyr["lrelu"],
                out_dtype=jnp.float32 if last else jnp.bfloat16,
                negative_slope=0.2)
        return jnp.transpose(x, (0, 3, 1, 2))           # back to NCHW


# --------------------------------- main ------------------------------------ #

if __name__ == "__main__":
    key = jax.random.PRNGKey(0)
    key, xkey = jax.random.split(key)

    # Small but structurally faithful config:
    #   image_size=16 -> up_times=1, first_hidden_dim=16
    #   conv(3->16, k4 s2 p1)+LReLU : 16x16 -> 8x8
    #   conv(16->32, k4 s2 p1)+LReLU:  8x8  -> 4x4
    #   conv(32->8,  k4 s1 p0)      :  4x4  -> 1x1
    model = D(key, output_dim=8, input_dim=3, image_size=16,
              GDscale=2, Dscale4G=1, hidden_scale=2)

    x = jax.random.normal(xkey, (2, 3, 16, 16), jnp.float32)  # NCHW
    fwd = jax.jit(lambda inp: model(inp))
    y = fwd(x)
    jax.block_until_ready(y)
    assert y.shape == (2, 8, 1, 1), y.shape
    assert jnp.all(jnp.isfinite(y))
    print("KERNEL_OK")
</pallas_src>

<mosaic_0001>
module attributes {stable_mosaic.version = 11 : i64} {
  func.func @_matmul_lrelu_kernel_noacc(%arg0: i32, %arg1: i32, %arg2: i32, %arg3: memref<128x48xbf16, #tpu.memory_space<vmem>>, %arg4: memref<48x16xbf16, #tpu.memory_space<vmem>>, %arg5: memref<128x16xbf16, #tpu.memory_space<vmem>>) attributes {dimension_semantics = [#tpu.dimension_semantics<parallel>, #tpu.dimension_semantics<parallel>, #tpu.dimension_semantics<arbitrary>], iteration_bounds = array<i64: 1, 1, 1>, scalar_prefetch = 0 : i64, scratch_operands = 0 : i64, tpu.core_type = #tpu.core_type<tc>, window_params = [{transform_indices = @transform_0, window_bounds = array<i64: 128, 48>}, {transform_indices = @transform_1, window_bounds = array<i64: 48, 16>}, {transform_indices = @transform_2, window_bounds = array<i64: 128, 16>}]} {
    %c0 = arith.constant 0 : index
    %c0_0 = arith.constant 0 : index
    %0 = vector.load %arg3[%c0, %c0_0] : memref<128x48xbf16, #tpu.memory_space<vmem>>, vector<128x48xbf16>
    %c0_1 = arith.constant 0 : index
    %c0_2 = arith.constant 0 : index
    %1 = vector.load %arg4[%c0_1, %c0_2] : memref<48x16xbf16, #tpu.memory_space<vmem>>, vector<48x16xbf16>
    %cst = arith.constant dense<0.000000e+00> : vector<128x16xf32>
    %2 = tpu.matmul %0, %1, %cst {dimension_numbers = #tpu.dot_dimension_numbers<[1], [0], [0], [1], [0, 0, 1, 1], [], []>} : vector<128x48xbf16>, vector<48x16xbf16>, vector<128x16xf32> -> vector<128x16xf32>
    %cst_3 = arith.constant 0.000000e+00 : f32
    %3 = vector.broadcast %cst_3 : f32 to vector<128x16xf32>
    %4 = arith.cmpf oge, %2, %3 : vector<128x16xf32>
    %cst_4 = arith.constant 2.000000e-01 : f32
    %5 = vector.broadcast %cst_4 : f32 to vector<128x16xf32>
    %6 = arith.mulf %5, %2 : vector<128x16xf32>
    %7 = arith.select %4, %2, %6 : vector<128x16xi1>, vector<128x16xf32>
    %8 = arith.truncf %7 : vector<128x16xf32> to vector<128x16xbf16>
    %c0_5 = arith.constant 0 : index
    %c0_6 = arith.constant 0 : index
    %9 = vector.load %arg5[%c0_5, %c0_6] : memref<128x16xbf16, #tpu.memory_space<vmem>>, vector<128x16xbf16>
    tpu.vector_store %arg5[%c0_5, %c0_6], %8 {strides = array<i32>} : memref<128x16xbf16, #tpu.memory_space<vmem>>, vector<128x16xbf16>,
    return
  }
  func.func @transform_0(%arg0: i32, %arg1: i32, %arg2: i32) -> (i32, i32) {
    %c0_i32 = arith.constant 0 : i32
    return %arg0, %arg2 : i32, i32
  }
  func.func @transform_1(%arg0: i32, %arg1: i32, %arg2: i32) -> (i32, i32) {
    %c0_i32 = arith.constant 0 : i32
    return %arg2, %arg1 : i32, i32
  }
  func.func @transform_2(%arg0: i32, %arg1: i32, %arg2: i32) -> (i32, i32) {
    %c0_i32 = arith.constant 0 : i32
    return %arg0, %arg1 : i32, i32
  }
}

module attributes {stable_mosaic.version = 11 : i64} {
  func.func @_matmul_lrelu_kernel_noacc(%arg0: i32, %arg1: i32, %arg2: i32, %arg3: memref<32x256xbf16, #tpu.memory_space<vmem>>, %arg4: memref<256x32xbf16, #tpu.memory_space<vmem>>, %arg5: memref<32x32xbf16, #tpu.memory_space<vmem>>) attributes {dimension_semantics = [#tpu.dimension_semantics<parallel>, #tpu.dimension_semantics<parallel>, #tpu.dimension_semantics<arbitrary>], iteration_bounds = array<i64: 1, 1, 1>, scalar_prefetch = 0 : i64, scratch_operands = 0 : i64, tpu.core_type = #tpu.core_type<tc>, window_params = [{transform_indices = @transform_0, window_bounds = array<i64: 32, 256>}, {transform_indices = @transform_1, window_bounds = array<i64: 256, 32>}, {transform_indices = @transform_2, window_bounds = array<i64: 32, 32>}]} {
    %c0 = arith.constant 0 : index
    %c0_0 = arith.constant 0 : index
    %0 = vector.load %arg3[%c0, %c0_0] : memref<32x256xbf16, #tpu.memory_space<vmem>>, vector<32x256xbf16>
    %c0_1 = arith.constant 0 : index
    %c0_2 = arith.constant 0 : index
    %1 = vector.load %arg4[%c0_1, %c0_2] : memref<256x32xbf16, #tpu.memory_space<vmem>>, vector<256x32xbf16>
    %cst = arith.constant dense<0.000000e+00> : vector<32x32xf32>
    %2 = tpu.matmul %0, %1, %cst {dimension_numbers = #tpu.dot_dimension_numbers<[1], [0], [0], [1], [0, 0, 1, 1], [], []>} : vector<32x256xbf16>, vector<256x32xbf16>, vector<32x32xf32> -> vector<32x32xf32>
    %cst_3 = arith.constant 0.000000e+00 : f32
    %3 = vector.broadcast %cst_3 : f32 to vector<32x32xf32>
    %4 = arith.cmpf oge, %2, %3 : vector<32x32xf32>
    %cst_4 = arith.constant 2.000000e-01 : f32
    %5 = vector.broadcast %cst_4 : f32 to vector<32x32xf32>
    %6 = arith.mulf %5, %2 : vector<32x32xf32>
    %7 = arith.select %4, %2, %6 : vector<32x32xi1>, vector<32x32xf32>
    %8 = arith.truncf %7 : vector<32x32xf32> to vector<32x32xbf16>
    %c0_5 = arith.constant 0 : index
    %c0_6 = arith.constant 0 : index
    %9 = vector.load %arg5[%c0_5, %c0_6] : memref<32x32xbf16, #tpu.memory_space<vmem>>, vector<32x32xbf16>
    tpu.vector_store %arg5[%c0_5, %c0_6], %8 {strides = array<i32>} : memref<32x32xbf16, #tpu.memory_space<vmem>>, vector<32x32xbf16>,
    return
  }
  func.func @transform_0(%arg0: i32, %arg1: i32, %arg2: i32) -> (i32, i32) {
    %c0_i32 = arith.constant 0 : i32
    return %arg0, %arg2 : i32, i32
  }
  func.func @transform_1(%arg0: i32, %arg1: i32, %arg2: i32) -> (i32, i32) {
    %c0_i32 = arith.constant 0 : i32
    return %arg2, %arg1 : i32, i32
  }
  func.func @transform_2(%arg0: i32, %arg1: i32, %arg2: i32) -> (i32, i32) {
    %c0_i32 = arith.constant 0 : i32
    return %arg0, %arg1 : i32, i32
  }
}

module attributes {stable_mosaic.version = 11 : i64} {
  func.func @_matmul_lrelu_kernel_noacc(%arg0: i32, %arg1: i32, %arg2: i32, %arg3: memref<2x512xbf16, #tpu.memory_space<vmem>>, %arg4: memref<512x8xbf16, #tpu.memory_space<vmem>>, %arg5: memref<2x8xf32, #tpu.memory_space<vmem>>) attributes {dimension_semantics = [#tpu.dimension_semantics<parallel>, #tpu.dimension_semantics<parallel>, #tpu.dimension_semantics<arbitrary>], iteration_bounds = array<i64: 1, 1, 1>, scalar_prefetch = 0 : i64, scratch_operands = 0 : i64, tpu.core_type = #tpu.core_type<tc>, window_params = [{transform_indices = @transform_0, window_bounds = array<i64: 2, 512>}, {transform_indices = @transform_1, window_bounds = array<i64: 512, 8>}, {transform_indices = @transform_2, window_bounds = array<i64: 2, 8>}]} {
    %c0 = arith.constant 0 : index
    %c0_0 = arith.constant 0 : index
    %0 = vector.load %arg3[%c0, %c0_0] : memref<2x512xbf16, #tpu.memory_space<vmem>>, vector<2x512xbf16>
    %c0_1 = arith.constant 0 : index
    %c0_2 = arith.constant 0 : index
    %1 = vector.load %arg4[%c0_1, %c0_2] : memref<512x8xbf16, #tpu.memory_space<vmem>>, vector<512x8xbf16>
    %cst = arith.constant dense<0.000000e+00> : vector<2x8xf32>
    %2 = tpu.matmul %0, %1, %cst {dimension_numbers = #tpu.dot_dimension_numbers<[1], [0], [0], [1], [0, 0, 1, 1], [], []>} : vector<2x512xbf16>, vector<512x8xbf16>, vector<2x8xf32> -> vector<2x8xf32>
    %c0_3 = arith.constant 0 : index
    %c0_4 = arith.constant 0 : index
    %3 = vector.load %arg5[%c0_3, %c0_4] : memref<2x8xf32, #tpu.memory_space<vmem>>, vector<2x8xf32>
    tpu.vector_store %arg5[%c0_3, %c0_4], %2 {strides = array<i32>} : memref<2x8xf32, #tpu.memory_space<vmem>>, vector<2x8xf32>,
    return
  }
  func.func @transform_0(%arg0: i32, %arg1: i32, %arg2: i32) -> (i32, i32) {
    %c0_i32 = arith.constant 0 : i32
    return %arg0, %arg2 : i32, i32
  }
  func.func @transform_1(%arg0: i32, %arg1: i32, %arg2: i32) -> (i32, i32) {
    %c0_i32 = arith.constant 0 : i32
    return %arg2, %arg1 : i32, i32
  }
  func.func @transform_2(%arg0: i32, %arg1: i32, %arg2: i32) -> (i32, i32) {
    %c0_i32 = arith.constant 0 : i32
    return %arg0, %arg1 : i32, i32
  }
}

</mosaic_0001>

<llo_original>
// kernel: _lambda_.3
$region0: #{_lambda_.3}
  #allocation0 [shape = 'u32[]', space=smem, size = 0x4, offset = 0x4, fixed_abs, tag = 'smem constant byte address 0x4 - core index']
  #allocation1 [shape = 'u32[144,128]{1,0:T(1,128)}', space=vmem, size = 0x12000, scoped, tag = 'internal scratch']
  %s0 = inlined_call_operand.vmem [shape: bf16[128,48], index: 0, kind: input, shape index: {}]
  %s1 = inlined_call_operand.vmem [shape: bf16[48,16], index: 1, kind: input, shape index: {}]
  %s2 = inlined_call_operand.vmem [shape: bf16[128,16], index: 2, kind: output, shape index: {}]
  %s3 = sld [smem:[#allocation0]]
  $region18: #{_lambda_.3} parent=0
    _
  %s5 = ssub.s32 1, %s3
  %s6 = scalar_select 0, %s5, %s3
  // Predicated region
  $region2: #{_lambda_.3} parent=0 // pred_check
    _
  $region3: #{_lambda_.3} parent=0 // pred_check_branch
    %8 = sbr.rel (0) target = $region5
  $region4: #{_lambda_.3} parent=0 // pred_region
    _
  $region5: #{_lambda_.3} parent=0 // pred_fallthru
    _
  // Predicated region
  $region6: #{_lambda_.3} parent=0 // pred_check
    _
  $region7: #{_lambda_.3} parent=0 // pred_check_branch
    %10 = sbr.rel (0) target = $region9
  $region8: #{_lambda_.3} parent=0 // pred_region
    _
  $region9: #{_lambda_.3} parent=0 // pred_fallthru
    _
  %v12 = vld [vmem:[%s0] sm:$0xf]
  %v13 = vld [vmem:[%s0 + $0x4] sm:$0xf]
  %v14 = vld [vmem:[%s0 + $0x8] sm:$0xf]
  %v15 = vld [vmem:[%s0 + $0xc] sm:$0xf]
  %v16 = vld [vmem:[%s0 + $0x10] sm:$0xf]
  %v17 = vld [vmem:[%s0 + $0x14] sm:$0xf]
  %v18 = vld [vmem:[%s0 + $0x18] sm:$0xf]
  %v19 = vld [vmem:[%s0 + $0x1c] sm:$0xf]
  %v20 = vld [vmem:[%s0 + $0x20] sm:$0xf]
  %v21 = vld [vmem:[%s0 + $0x24] sm:$0xf]
  %v22 = vld [vmem:[%s0 + $0x28] sm:$0xf]
  %v23 = vld [vmem:[%s0 + $0x2c] sm:$0xf]
  %v24 = vld [vmem:[%s0 + $0x30] sm:$0xf]
  %v25 = vld [vmem:[%s0 + $0x34] sm:$0xf]
  %v26 = vld [vmem:[%s0 + $0x38] sm:$0xf]
  %v27 = vld [vmem:[%s0 + $0x3c] sm:$0xf]
  %v28 = vld [vmem:[%s1] sm:$0xf]
  %v29 = vld [vmem:[%s1 + $0x4] sm:$0xf]
  %v30 = vld [vmem:[%s1 + $0x8] sm:$0xf]
  %v31 = vld [vmem:[%s1 + $0xc] sm:$0xf]
  %v32 = vld [vmem:[%s1 + $0x10] sm:$0xf]
  %v33 = vld [vmem:[%s1 + $0x14] sm:$0xf]
  %v50 = vunpack.c.l.b16 %v12
  %v51 = vunpack.c.l.b16 %v13
  %v52 = vunpack.c.l.b16 %v14
  %v53 = vunpack.c.l.b16 %v15
  %v54 = vunpack.c.l.b16 %v16
  %v55 = vunpack.c.l.b16 %v17
  %v56 = vunpack.c.l.b16 %v18
  %v57 = vunpack.c.l.b16 %v19
  %v58 = vunpack.c.l.b16 %v20
  %v59 = vunpack.c.l.b16 %v21
  %v60 = vunpack.c.l.b16 %v22
  %v61 = vunpack.c.l.b16 %v23
  %v62 = vunpack.c.l.b16 %v24
  %v63 = vunpack.c.l.b16 %v25
  %v64 = vunpack.c.l.b16 %v26
  %v65 = vunpack.c.l.b16 %v27
  %v66 = vpack.c.b16 %v51, %v50
  %v67 = vpack.c.b16 %v53, %v52
  %v68 = vpack.c.b16 %v55, %v54
  %v69 = vpack.c.b16 %v57, %v56
  %v70 = vpack.c.b16 %v59, %v58
  %v71 = vpack.c.b16 %v61, %v60
  %v72 = vpack.c.b16 %v63, %v62
  %v73 = vpack.c.b16 %v65, %v64
  %v80 = vunpack.c.l.b16 %v28
  %v81 = vunpack.c.l.b16 %v29
  %v82 = vunpack.c.l.b16 %v30
  %v83 = vunpack.c.l.b16 %v31
  %v84 = vunpack.c.l.b16 %v32
  %v85 = vunpack.c.l.b16 %v33
  %v86 = vpack.c.b16 %v81, %v80
  %v87 = vpack.c.b16 %v83, %v82
  %v88 = vpack.c.b16 %v85, %v84
  %vm92 = vcmask 392192
  %v94 = vsel %vm92, %v66, 0
  %v97 = vsel %vm92, %v67, 0
  %v100 = vsel %vm92, %v68, 0
  %v103 = vsel %vm92, %v69, 0
  %v106 = vsel %vm92, %v70, 0
  %v109 = vsel %vm92, %v71, 0
  %v112 = vsel %vm92, %v72, 0
  %v115 = vsel %vm92, %v73, 0
  %117 = vmatprep.subr.bf16.mxu0 0
  %118 = vmatpush1.bf16.msra.mxu0 %v86
  %119 = vmatprep.subr.bf16.mxu0 0
  %120 = vmatpush1.bf16.msra.mxu0 %v87
  %121 = vmatprep.subr.bf16.mxu0 0
  %122 = vmatpush1.bf16.msra.mxu0 %v88
  %123 = vmatprep.subr.bf16.mxu0 0
  %124 = vmatpush1.bf16.msra.mxu0 0
  %125 = vmatprep.subr.bf16.mxu0 0
  %126 = vmatpush1.bf16.msra.mxu0 0
  %127 = vmatprep.subr.bf16.mxu0 0
  %128 = vmatpush1.bf16.msra.mxu0 0
  %129 = vmatprep.subr.bf16.mxu0 0
  %130 = vmatpush1.bf16.msra.mxu0 0
  %131 = vmatprep.subr.bf16.mxu0 0
  %132 = vmatpush1.bf16.msra.mxu0 0
  %133 = vmatprep.subr.bf16.mxu0 0
  %134 = vmatpush1.bf16.msra.mxu0 0
  %135 = vmatprep.subr.bf16.mxu0 0
  %136 = vmatpush1.bf16.msra.mxu0 0
  %137 = vmatprep.subr.bf16.mxu0 0
  %138 = vmatpush1.bf16.msra.mxu0 0
  %139 = vmatprep.subr.bf16.mxu0 0
  %140 = vmatpush1.bf16.msra.mxu0 0
  %141 = vmatprep.subr.bf16.mxu0 0
  %142 = vmatpush1.bf16.msra.mxu0 0
  %143 = vmatprep.subr.bf16.mxu0 0
  %144 = vmatpush1.bf16.msra.mxu0 0
  %145 = vmatprep.subr.bf16.mxu0 0
  %146 = vmatpush1.bf16.msra.mxu0 0
  %147 = vmatprep.subr.bf16.mxu0 0
  %148 = vmatpush1.bf16.msra.mxu0 0
  %149 = vmatprep.mubr.bf16.mxu0 0
  %150 = vmatmul.mubr.bf16.gmra.mrb[0].mxu0 %v94
  %v151 = vpop.f32.mrb[0].mxu0
  %v152 = vadd.f32 0.0, %v151
  %v153 = vpop.f32.mrb[0].mxu0
  %v154 = vpop.f32.mrb[0].mxu0
  %v155 = vadd.f32 0.0, %v154
  %v156 = vpop.f32.mrb[0].mxu0
  %157 = vmatprep.mubr.bf16.mxu0 0
  %158 = vmatmul.mubr.bf16.gmra.mrb[0].mxu0 %v97
  %v159 = vpop.f32.mrb[0].mxu0
  %v160 = vadd.f32 0.0, %v159
  %v161 = vpop.f32.mrb[0].mxu0
  %v162 = vpop.f32.mrb[0].mxu0
  %v163 = vadd.f32 0.0, %v162
  %v164 = vpop.f32.mrb[0].mxu0
  %165 = vmatprep.mubr.bf16.mxu0 0
  %166 = vmatmul.mubr.bf16.gmra.mrb[0].mxu0 %v100
  %v167 = vpop.f32.mrb[0].mxu0
  %v168 = vadd.f32 0.0, %v167
  %v169 = vpop.f32.mrb[0].mxu0
  %v170 = vpop.f32.mrb[0].mxu0
  %v171 = vadd.f32 0.0, %v170
  %v172 = vpop.f32.mrb[0].mxu0
  %173 = vmatprep.mubr.bf16.mxu0 0
  %174 = vmatmul.mubr.bf16.gmra.mrb[0].mxu0 %v103
  %v175 = vpop.f32.mrb[0].mxu0
  %v176 = vadd.f32 0.0, %v175
  %v177 = vpop.f32.mrb[0].mxu0
  %v178 = vpop.f32.mrb[0].mxu0
  %v179 = vadd.f32 0.0, %v178
  %v180 = vpop.f32.mrb[0].mxu0
  %181 = vmatprep.mubr.bf16.mxu0 0
  %182 = vmatmul.mubr.bf16.gmra.mrb[0].mxu0 %v106
  %v183 = vpop.f32.mrb[0].mxu0
  %v184 = vadd.f32 0.0, %v183
  %v185 = vpop.f32.mrb[0].mxu0
  %v186 = vpop.f32.mrb[0].mxu0
  %v187 = vadd.f32 0.0, %v186
  %v188 = vpop.f32.mrb[0].mxu0
  %189 = vmatprep.mubr.bf16.mxu0 0
  %190 = vmatmul.mubr.bf16.gmra.mrb[0].mxu0 %v109
  %v191 = vpop.f32.mrb[0].mxu0
  %v192 = vadd.f32 0.0, %v191
  %v193 = vpop.f32.mrb[0].mxu0
  %v194 = vpop.f32.mrb[0].mxu0
  %v195 = vadd.f32 0.0, %v194
  %v196 = vpop.f32.mrb[0].mxu0
  %197 = vmatprep.mubr.bf16.mxu0 0
  %198 = vmatmul.mubr.bf16.gmra.mrb[0].mxu0 %v112
  %v199 = vpop.f32.mrb[0].mxu0
  %v200 = vadd.f32 0.0, %v199
  %v201 = vpop.f32.mrb[0].mxu0
  %v202 = vpop.f32.mrb[0].mxu0
  %v203 = vadd.f32 0.0, %v202
  %v204 = vpop.f32.mrb[0].mxu0
  %205 = vmatprep.mubr.bf16.mxu0 0
  %206 = vmatmul.mubr.bf16.gmra.mrb[0].mxu0 %v115
  %v207 = vpop.f32.mrb[0].mxu0
  %v208 = vadd.f32 0.0, %v207
  %v209 = vpop.f32.mrb[0].mxu0
  %v210 = vpop.f32.mrb[0].mxu0
  %v211 = vadd.f32 0.0, %v210
  %v212 = vpop.f32.mrb[0].mxu0
  %213 = vdwg.mxu0
  %vm214 = vcmp.ge.f32.partialorder %v152, 0.0
  %vm215 = vcmp.ge.f32.partialorder %v155, 0.0
  %vm216 = vcmp.ge.f32.partialorder %v160, 0.0
  %vm217 = vcmp.ge.f32.partialorder %v163, 0.0
  %vm218 = vcmp.ge.f32.partialorder %v168, 0.0
  %vm219 = vcmp.ge.f32.partialorder %v171, 0.0
  %vm220 = vcmp.ge.f32.partialorder %v176, 0.0
  %vm221 = vcmp.ge.f32.partialorder %v179, 0.0
  %vm222 = vcmp.ge.f32.partialorder %v184, 0.0
  %vm223 = vcmp.ge.f32.partialorder %v187, 0.0
  %vm224 = vcmp.ge.f32.partialorder %v192, 0.0
  %vm225 = vcmp.ge.f32.partialorder %v195, 0.0
  %vm226 = vcmp.ge.f32.partialorder %v200, 0.0
  %vm227 = vcmp.ge.f32.partialorder %v203, 0.0
  %vm228 = vcmp.ge.f32.partialorder %v208, 0.0
  %vm229 = vcmp.ge.f32.partialorder %v211, 0.0
  %v230 = vmul.f32 %v152, 0.2
  %v231 = vmul.f32 %v155, 0.2
  %v232 = vmul.f32 %v160, 0.2
  %v233 = vmul.f32 %v163, 0.2
  %v234 = vmul.f32 %v168, 0.2
  %v235 = vmul.f32 %v171, 0.2
  %v236 = vmul.f32 %v176, 0.2
  %v237 = vmul.f32 %v179, 0.2
  %v238 = vmul.f32 %v184, 0.2
  %v239 = vmul.f32 %v187, 0.2
  %v240 = vmul.f32 %v192, 0.2
  %v241 = vmul.f32 %v195, 0.2
  %v242 = vmul.f32 %v200, 0.2
  %v243 = vmul.f32 %v203, 0.2
  %v244 = vmul.f32 %v208, 0.2
  %v245 = vmul.f32 %v211, 0.2
  %v246 = vsel %vm214, %v152, %v230
  %v247 = vsel %vm215, %v155, %v231
  %v248 = vsel %vm216, %v160, %v232
  %v249 = vsel %vm217, %v163, %v233
  %v250 = vsel %vm218, %v168, %v234
  %v251 = vsel %vm219, %v171, %v235
  %v252 = vsel %vm220, %v176, %v236
  %v253 = vsel %vm221, %v179, %v237
  %v254 = vsel %vm222, %v184, %v238
  %v255 = vsel %vm223, %v187, %v239
  %v256 = vsel %vm224, %v192, %v240
  %v257 = vsel %vm225, %v195, %v241
  %v258 = vsel %vm226, %v200, %v242
  %v259 = vsel %vm227, %v203, %v243
  %v260 = vsel %vm228, %v208, %v244
  %v261 = vsel %vm229, %v211, %v245
  %v262 = vpack.c.bf16 %v247, %v246
  %v263 = vpack.c.bf16 %v249, %v248
  %v264 = vpack.c.bf16 %v251, %v250
  %v265 = vpack.c.bf16 %v253, %v252
  %v266 = vpack.c.bf16 %v255, %v254
  %v267 = vpack.c.bf16 %v257, %v256
  %v268 = vpack.c.bf16 %v259, %v258
  %v269 = vpack.c.bf16 %v261, %v260
  %v278 = vunpack.c.l.b16 %v262
  %v279 = vunpack.c.h.b16 %v262
  %v280 = vunpack.c.l.b16 %v263
  %v281 = vunpack.c.h.b16 %v263
  %v282 = vunpack.c.l.b16 %v264
  %v283 = vunpack.c.h.b16 %v264
  %v284 = vunpack.c.l.b16 %v265
  %v285 = vunpack.c.h.b16 %v265
  %v286 = vunpack.c.l.b16 %v266
  %v287 = vunpack.c.h.b16 %v266
  %v288 = vunpack.c.l.b16 %v267
  %v289 = vunpack.c.h.b16 %v267
  %v290 = vunpack.c.l.b16 %v268
  %v291 = vunpack.c.h.b16 %v268
  %v292 = vunpack.c.l.b16 %v269
  %v293 = vunpack.c.h.b16 %v269
  %v294 = vpack.c.b16 %v278, %v278
  %v295 = vpack.c.b16 %v279, %v279
  %v296 = vpack.c.b16 %v280, %v280
  %v297 = vpack.c.b16 %v281, %v281
  %v298 = vpack.c.b16 %v282, %v282
  %v299 = vpack.c.b16 %v283, %v283
  %v300 = vpack.c.b16 %v284, %v284
  %v301 = vpack.c.b16 %v285, %v285
  %v302 = vpack.c.b16 %v286, %v286
  %v303 = vpack.c.b16 %v287, %v287
  %v304 = vpack.c.b16 %v288, %v288
  %v305 = vpack.c.b16 %v289, %v289
  %v306 = vpack.c.b16 %v290, %v290
  %v307 = vpack.c.b16 %v291, %v291
  %v308 = vpack.c.b16 %v292, %v292
  %v309 = vpack.c.b16 %v293, %v293
  %vm326 = vcmask 125952
  %327 = vst.msk [vmem:[%s2] sm:$0xf] %vm326, %v294
  %328 = vst.msk [vmem:[%s2 + $0x4] sm:$0xf] %vm326, %v295
  %329 = vst.msk [vmem:[%s2 + $0x8] sm:$0xf] %vm326, %v296
  %330 = vst.msk [vmem:[%s2 + $0xc] sm:$0xf] %vm326, %v297
  %331 = vst.msk [vmem:[%s2 + $0x10] sm:$0xf] %vm326, %v298
  %332 = vst.msk [vmem:[%s2 + $0x14] sm:$0xf] %vm326, %v299
  %333 = vst.msk [vmem:[%s2 + $0x18] sm:$0xf] %vm326, %v300
  %334 = vst.msk [vmem:[%s2 + $0x1c] sm:$0xf] %vm326, %v301
  %335 = vst.msk [vmem:[%s2 + $0x20] sm:$0xf] %vm326, %v302
  %336 = vst.msk [vmem:[%s2 + $0x24] sm:$0xf] %vm326, %v303
  %337 = vst.msk [vmem:[%s2 + $0x28] sm:$0xf] %vm326, %v304
  %338 = vst.msk [vmem:[%s2 + $0x2c] sm:$0xf] %vm326, %v305
  %339 = vst.msk [vmem:[%s2 + $0x30] sm:$0xf] %vm326, %v306
  %340 = vst.msk [vmem:[%s2 + $0x34] sm:$0xf] %vm326, %v307
  %341 = vst.msk [vmem:[%s2 + $0x38] sm:$0xf] %vm326, %v308
  %342 = vst.msk [vmem:[%s2 + $0x3c] sm:$0xf] %vm326, %v309
  // Predicated region
  $region10: #{_lambda_.3} parent=0 // pred_check
    _
  $region11: #{_lambda_.3} parent=0 // pred_check_branch
    %344 = sbr.rel (0) target = $region13
  $region12: #{_lambda_.3} parent=0 // pred_region
    _
  $region13: #{_lambda_.3} parent=0 // pred_fallthru
    _
  // Predicated region
  $region14: #{_lambda_.3} parent=0 // pred_check
    _
  $region15: #{_lambda_.3} parent=0 // pred_check_branch
    %346 = sbr.rel (0) target = $region17
  $region16: #{_lambda_.3} parent=0 // pred_region
    _
  $region17: #{_lambda_.3} parent=0 // pred_fallthru
    _

// kernel: _lambda_.4
$region0: #{_lambda_.4}
  #allocation0 [shape = 'u32[]', space=smem, size = 0x4, offset = 0x4, fixed_abs, tag = 'smem constant byte address 0x4 - core index']
  #allocation1 [shape = 'u32[144,128]{1,0:T(1,128)}', space=vmem, size = 0x12000, scoped, tag = 'internal scratch']
  %s0 = inlined_call_operand.vmem [shape: bf16[32,256], index: 0, kind: input, shape index: {}]
  %s1 = inlined_call_operand.vmem [shape: bf16[256,32], index: 1, kind: input, shape index: {}]
  %s2 = inlined_call_operand.vmem [shape: bf16[32,32], index: 2, kind: output, shape index: {}]
  %s3 = sld [smem:[#allocation0]]
  $region18: #{_lambda_.4} parent=0
    _
  %s5 = ssub.s32 1, %s3
  %s6 = scalar_select 0, %s5, %s3
  // Predicated region
  $region2: #{_lambda_.4} parent=0 // pred_check
    _
  $region3: #{_lambda_.4} parent=0 // pred_check_branch
    %8 = sbr.rel (0) target = $region5
  $region4: #{_lambda_.4} parent=0 // pred_region
    _
  $region5: #{_lambda_.4} parent=0 // pred_fallthru
    _
  // Predicated region
  $region6: #{_lambda_.4} parent=0 // pred_check
    _
  $region7: #{_lambda_.4} parent=0 // pred_check_branch
    %10 = sbr.rel (0) target = $region9
  $region8: #{_lambda_.4} parent=0 // pred_region
    _
  $region9: #{_lambda_.4} parent=0 // pred_fallthru
    _
  %v12 = vld [vmem:[%s0] sm:$0xff]
  %v13 = vld [vmem:[%s0 + $0x8] sm:$0xff]
  %v14 = vld [vmem:[%s0 + $0x10] sm:$0xff]
  %v15 = vld [vmem:[%s0 + $0x18] sm:$0xff]
  %v16 = vld [vmem:[%s1] sm:$0xf]
  %v17 = vld [vmem:[%s1 + $0x4] sm:$0xf]
  %v18 = vld [vmem:[%s1 + $0x8] sm:$0xf]
  %v19 = vld [vmem:[%s1 + $0xc] sm:$0xf]
  %v20 = vld [vmem:[%s1 + $0x10] sm:$0xf]
  %v21 = vld [vmem:[%s1 + $0x14] sm:$0xf]
  %v22 = vld [vmem:[%s1 + $0x18] sm:$0xf]
  %v23 = vld [vmem:[%s1 + $0x1c] sm:$0xf]
  %v24 = vld [vmem:[%s1 + $0x20] sm:$0xf]
  %v25 = vld [vmem:[%s1 + $0x24] sm:$0xf]
  %v26 = vld [vmem:[%s1 + $0x28] sm:$0xf]
  %v27 = vld [vmem:[%s1 + $0x2c] sm:$0xf]
  %v28 = vld [vmem:[%s1 + $0x30] sm:$0xf]
  %v29 = vld [vmem:[%s1 + $0x34] sm:$0xf]
  %v30 = vld [vmem:[%s1 + $0x38] sm:$0xf]
  %v31 = vld [vmem:[%s1 + $0x3c] sm:$0xf]
  %v32 = vld [vmem:[%s1 + $0x40] sm:$0xf]
  %v33 = vld [vmem:[%s1 + $0x44] sm:$0xf]
  %v34 = vld [vmem:[%s1 + $0x48] sm:$0xf]
  %v35 = vld [vmem:[%s1 + $0x4c] sm:$0xf]
  %v36 = vld [vmem:[%s1 + $0x50] sm:$0xf]
  %v37 = vld [vmem:[%s1 + $0x54] sm:$0xf]
  %v38 = vld [vmem:[%s1 + $0x58] sm:$0xf]
  %v39 = vld [vmem:[%s1 + $0x5c] sm:$0xf]
  %v40 = vld [vmem:[%s1 + $0x60] sm:$0xf]
  %v41 = vld [vmem:[%s1 + $0x64] sm:$0xf]
  %v42 = vld [vmem:[%s1 + $0x68] sm:$0xf]
  %v43 = vld [vmem:[%s1 + $0x6c] sm:$0xf]
  %v44 = vld [vmem:[%s1 + $0x70] sm:$0xf]
  %v45 = vld [vmem:[%s1 + $0x74] sm:$0xf]
  %v46 = vld [vmem:[%s1 + $0x78] sm:$0xf]
  %v47 = vld [vmem:[%s1 + $0x7c] sm:$0xf]
  %v52 = vunpack.c.l.b16 %v12
  %v53 = vunpack.c.h.b16 %v12
  %v54 = vunpack.c.l.b16 %v13
  %v55 = vunpack.c.h.b16 %v13
  %v56 = vunpack.c.l.b16 %v14
  %v57 = vunpack.c.h.b16 %v14
  %v58 = vunpack.c.l.b16 %v15
  %v59 = vunpack.c.h.b16 %v15
  %v60 = vpack.c.b16 %v54, %v52
  %v61 = vpack.c.b16 %v55, %v53
  %v62 = vpack.c.b16 %v58, %v56
  %v63 = vpack.c.b16 %v59, %v57
  %v100 = vunpack.c.l.b16 %v16
  %v101 = vunpack.c.l.b16 %v17
  %v102 = vunpack.c.l.b16 %v18
  %v103 = vunpack.c.l.b16 %v19
  %v104 = vunpack.c.l.b16 %v20
  %v105 = vunpack.c.l.b16 %v21
  %v106 = vunpack.c.l.b16 %v22
  %v107 = vunpack.c.l.b16 %v23
  %v108 = vunpack.c.l.b16 %v24
  %v109 = vunpack.c.l.b16 %v25
  %v110 = vunpack.c.l.b16 %v26
  %v111 = vunpack.c.l.b16 %v27
  %v112 = vunpack.c.l.b16 %v28
  %v113 = vunpack.c.l.b16 %v29
  %v114 = vunpack.c.l.b16 %v30
  %v115 = vunpack.c.l.b16 %v31
  %v116 = vunpack.c.l.b16 %v32
  %v117 = vunpack.c.l.b16 %v33
  %v118 = vunpack.c.l.b16 %v34
  %v119 = vunpack.c.l.b16 %v35
  %v120 = vunpack.c.l.b16 %v36
  %v121 = vunpack.c.l.b16 %v37
  %v122 = vunpack.c.l.b16 %v38
  %v123 = vunpack.c.l.b16 %v39
  %v124 = vunpack.c.l.b16 %v40
  %v125 = vunpack.c.l.b16 %v41
  %v126 = vunpack.c.l.b16 %v42
  %v127 = vunpack.c.l.b16 %v43
  %v128 = vunpack.c.l.b16 %v44
  %v129 = vunpack.c.l.b16 %v45
  %v130 = vunpack.c.l.b16 %v46
  %v131 = vunpack.c.l.b16 %v47
  %v132 = vpack.c.b16 %v101, %v100
  %v133 = vpack.c.b16 %v103, %v102
  %v134 = vpack.c.b16 %v105, %v104
  %v135 = vpack.c.b16 %v107, %v106
  %v136 = vpack.c.b16 %v109, %v108
  %v137 = vpack.c.b16 %v111, %v110
  %v138 = vpack.c.b16 %v113, %v112
  %v139 = vpack.c.b16 %v115, %v114
  %v140 = vpack.c.b16 %v117, %v116
  %v141 = vpack.c.b16 %v119, %v118
  %v142 = vpack.c.b16 %v121, %v120
  %v143 = vpack.c.b16 %v123, %v122
  %v144 = vpack.c.b16 %v125, %v124
  %v145 = vpack.c.b16 %v127, %v126
  %v146 = vpack.c.b16 %v129, %v128
  %v147 = vpack.c.b16 %v131, %v130
  %164 = vmatprep.subr.bf16.mxu0 0
  %165 = vmatpush1.bf16.msra.mxu0 %v132
  %166 = vmatprep.subr.bf16.mxu0 0
  %167 = vmatpush1.bf16.msra.mxu0 %v133
  %168 = vmatprep.subr.bf16.mxu0 0
  %169 = vmatpush1.bf16.msra.mxu0 %v134
  %170 = vmatprep.subr.bf16.mxu0 0
  %171 = vmatpush1.bf16.msra.mxu0 %v135
  %172 = vmatprep.subr.bf16.mxu0 0
  %173 = vmatpush1.bf16.msra.mxu0 %v136
  %174 = vmatprep.subr.bf16.mxu0 0
  %175 = vmatpush1.bf16.msra.mxu0 %v137
  %176 = vmatprep.subr.bf16.mxu0 0
  %177 = vmatpush1.bf16.msra.mxu0 %v138
  %178 = vmatprep.subr.bf16.mxu0 0
  %179 = vmatpush1.bf16.msra.mxu0 %v139
  %180 = vmatprep.subr.bf16.mxu0 0
  %181 = vmatpush1.bf16.msra.mxu0 %v140
  %182 = vmatprep.subr.bf16.mxu0 0
  %183 = vmatpush1.bf16.msra.mxu0 %v141
  %184 = vmatprep.subr.bf16.mxu0 0
  %185 = vmatpush1.bf16.msra.mxu0 %v142
  %186 = vmatprep.subr.bf16.mxu0 0
  %187 = vmatpush1.bf16.msra.mxu0 %v143
  %188 = vmatprep.subr.bf16.mxu0 0
  %189 = vmatpush1.bf16.msra.mxu0 %v144
  %190 = vmatprep.subr.bf16.mxu0 0
  %191 = vmatpush1.bf16.msra.mxu0 %v145
  %192 = vmatprep.subr.bf16.mxu0 0
  %193 = vmatpush1.bf16.msra.mxu0 %v146
  %194 = vmatprep.subr.bf16.mxu0 0
  %195 = vmatpush1.bf16.msra.mxu0 %v147
  %196 = vmatprep.mubr.bf16.mxu0 %v61
  %197 = vmatmul.mubr.bf16.gmra.mrb[0].mxu0 %v60
  %v198 = vpop.f32.mrb[0].mxu0
  %v199 = vadd.f32 0.0, %v198
  %v200 = vpop.f32.mrb[0].mxu0
  %v201 = vpop.f32.mrb[0].mxu0
  %v202 = vadd.f32 0.0, %v201
  %v203 = vpop.f32.mrb[0].mxu0
  %204 = vmatprep.mubr.bf16.mxu0 %v63
  %205 = vmatmul.mubr.bf16.gmra.mrb[0].mxu0 %v62
  %v206 = vpop.f32.mrb[0].mxu0
  %v207 = vadd.f32 0.0, %v206
  %v208 = vpop.f32.mrb[0].mxu0
  %v209 = vpop.f32.mrb[0].mxu0
  %v210 = vadd.f32 0.0, %v209
  %v211 = vpop.f32.mrb[0].mxu0
  %212 = vdwg.mxu0
  %vm213 = vcmp.ge.f32.partialorder %v199, 0.0
  %vm214 = vcmp.ge.f32.partialorder %v202, 0.0
  %vm215 = vcmp.ge.f32.partialorder %v207, 0.0
  %vm216 = vcmp.ge.f32.partialorder %v210, 0.0
  %v217 = vmul.f32 %v199, 0.2
  %v218 = vmul.f32 %v202, 0.2
  %v219 = vmul.f32 %v207, 0.2
  %v220 = vmul.f32 %v210, 0.2
  %v221 = vsel %vm213, %v199, %v217
  %v222 = vsel %vm214, %v202, %v218
  %v223 = vsel %vm215, %v207, %v219
  %v224 = vsel %vm216, %v210, %v220
  %v225 = vpack.c.bf16 %v222, %v221
  %v226 = vpack.c.bf16 %v224, %v223
  %v229 = vunpack.c.l.b16 %v225
  %v230 = vunpack.c.h.b16 %v225
  %v231 = vunpack.c.l.b16 %v226
  %v232 = vunpack.c.h.b16 %v226
  %v233 = vpack.c.b16 %v229, %v229
  %v234 = vpack.c.b16 %v230, %v230
  %v235 = vpack.c.b16 %v231, %v231
  %v236 = vpack.c.b16 %v232, %v232
  %vm241 = vcmask 257024
  %242 = vst.msk [vmem:[%s2] sm:$0xf] %vm241, %v233
  %243 = vst.msk [vmem:[%s2 + $0x4] sm:$0xf] %vm241, %v234
  %244 = vst.msk [vmem:[%s2 + $0x8] sm:$0xf] %vm241, %v235
  %245 = vst.msk [vmem:[%s2 + $0xc] sm:$0xf] %vm241, %v236
  // Predicated region
  $region10: #{_lambda_.4} parent=0 // pred_check
    _
  $region11: #{_lambda_.4} parent=0 // pred_check_branch
    %247 = sbr.rel (0) target = $region13
  $region12: #{_lambda_.4} parent=0 // pred_region
    _
  $region13: #{_lambda_.4} parent=0 // pred_fallthru
    _
  // Predicated region
  $region14: #{_lambda_.4} parent=0 // pred_check
    _
  $region15: #{_lambda_.4} parent=0 // pred_check_branch
    %249 = sbr.rel (0) target = $region17
  $region16: #{_lambda_.4} parent=0 // pred_region
    _
  $region17: #{_lambda_.4} parent=0 // pred_fallthru
    _

// kernel: _lambda_.5
$region0: #{_lambda_.5}
  #allocation0 [shape = 'u32[]', space=smem, size = 0x4, offset = 0x4, fixed_abs, tag = 'smem constant byte address 0x4 - core index']
  #allocation1 [shape = 'u32[144,128]{1,0:T(1,128)}', space=vmem, size = 0x12000, scoped, tag = 'internal scratch']
  %s0 = inlined_call_operand.vmem [shape: bf16[2,512], index: 0, kind: input, shape index: {}]
  %s1 = inlined_call_operand.vmem [shape: bf16[512,8], index: 1, kind: input, shape index: {}]
  %s2 = inlined_call_operand.hbm [shape: f32[2,8], index: 2, kind: output, shape index: {}]
  %s3 = sld [smem:[#allocation0]]
  $region18: #{_lambda_.5} parent=0
    _
  %s5 = ssub.s32 1, %s3
  %s6 = scalar_select 0, %s5, %s3
  $region1: #{_lambda_.5} parent=0
    #allocation2 [shape = 'u8[1024]{0}', space=vmem, size = 0x400, scoped, tag = 'output window, operand 0, single buffered']
    #allocation3 [shape = 's32[1]{0}', space=sflag, size = 0x4, scoped, tag = 'scoped memory for _lambda_.5']
    %7 = vsyncpa [#allocation3], 0
    // Predicated region
    $region2: #{_lambda_.5} parent=1 // pred_check
      _
    $region3: #{_lambda_.5} parent=1 // pred_check_branch
      %9 = sbr.rel (0) target = $region5
    $region4: #{_lambda_.5} parent=1 // pred_region
      _
    $region5: #{_lambda_.5} parent=1 // pred_fallthru
      _
    // Predicated region
    $region6: #{_lambda_.5} parent=1 // pred_check
      _
    $region7: #{_lambda_.5} parent=1 // pred_check_branch
      %11 = sbr.rel (0) target = $region9
    $region8: #{_lambda_.5} parent=1 // pred_region
      _
    $region9: #{_lambda_.5} parent=1 // pred_fallthru
      _
    %v13 = vld [vmem:[%s0] sm:$0xf]
    %v14 = vld [vmem:[%s1] sm:$0xf]
    %v15 = vld [vmem:[%s1 + $0x4] sm:$0xf]
    %v16 = vld [vmem:[%s1 + $0x8] sm:$0xf]
    %v17 = vld [vmem:[%s1 + $0xc] sm:$0xf]
    %v18 = vld [vmem:[%s1 + $0x10] sm:$0xf]
    %v19 = vld [vmem:[%s1 + $0x14] sm:$0xf]
    %v20 = vld [vmem:[%s1 + $0x18] sm:$0xf]
    %v21 = vld [vmem:[%s1 + $0x1c] sm:$0xf]
    %v22 = vld [vmem:[%s1 + $0x20] sm:$0xf]
    %v23 = vld [vmem:[%s1 + $0x24] sm:$0xf]
    %v24 = vld [vmem:[%s1 + $0x28] sm:$0xf]
    %v25 = vld [vmem:[%s1 + $0x2c] sm:$0xf]
    %v26 = vld [vmem:[%s1 + $0x30] sm:$0xf]
    %v27 = vld [vmem:[%s1 + $0x34] sm:$0xf]
    %v28 = vld [vmem:[%s1 + $0x38] sm:$0xf]
    %v29 = vld [vmem:[%s1 + $0x3c] sm:$0xf]
    %v30 = vld [vmem:[%s1 + $0x40] sm:$0xf]
    %v31 = vld [vmem:[%s1 + $0x44] sm:$0xf]
    %v32 = vld [vmem:[%s1 + $0x48] sm:$0xf]
    %v33 = vld [vmem:[%s1 + $0x4c] sm:$0xf]
    %v34 = vld [vmem:[%s1 + $0x50] sm:$0xf]
    %v35 = vld [vmem:[%s1 + $0x54] sm:$0xf]
    %v36 = vld [vmem:[%s1 + $0x58] sm:$0xf]
    %v37 = vld [vmem:[%s1 + $0x5c] sm:$0xf]
    %v38 = vld [vmem:[%s1 + $0x60] sm:$0xf]
    %v39 = vld [vmem:[%s1 + $0x64] sm:$0xf]
    %v40 = vld [vmem:[%s1 + $0x68] sm:$0xf]
    %v41 = vld [vmem:[%s1 + $0x6c] sm:$0xf]
    %v42 = vld [vmem:[%s1 + $0x70] sm:$0xf]
    %v43 = vld [vmem:[%s1 + $0x74] sm:$0xf]
    %v44 = vld [vmem:[%s1 + $0x78] sm:$0xf]
    %v45 = vld [vmem:[%s1 + $0x7c] sm:$0xf]
    %v46 = vld [vmem:[%s1 + $0x80] sm:$0xf]
    %v47 = vld [vmem:[%s1 + $0x84] sm:$0xf]
    %v48 = vld [vmem:[%s1 + $0x88] sm:$0xf]
    %v49 = vld [vmem:[%s1 + $0x8c] sm:$0xf]
    %v50 = vld [vmem:[%s1 + $0x90] sm:$0xf]
    %v51 = vld [vmem:[%s1 + $0x94] sm:$0xf]
    %v52 = vld [vmem:[%s1 + $0x98] sm:$0xf]
    %v53 = vld [vmem:[%s1 + $0x9c] sm:$0xf]
    %v54 = vld [vmem:[%s1 + $0xa0] sm:$0xf]
    %v55 = vld [vmem:[%s1 + $0xa4] sm:$0xf]
    %v56 = vld [vmem:[%s1 + $0xa8] sm:$0xf]
    %v57 = vld [vmem:[%s1 + $0xac] sm:$0xf]
    %v58 = vld [vmem:[%s1 + $0xb0] sm:$0xf]
    %v59 = vld [vmem:[%s1 + $0xb4] sm:$0xf]
    %v60 = vld [vmem:[%s1 + $0xb8] sm:$0xf]
    %v61 = vld [vmem:[%s1 + $0xbc] sm:$0xf]
    %v62 = vld [vmem:[%s1 + $0xc0] sm:$0xf]
    %v63 = vld [vmem:[%s1 + $0xc4] sm:$0xf]
    %v64 = vld [vmem:[%s1 + $0xc8] sm:$0xf]
    %v65 = vld [vmem:[%s1 + $0xcc] sm:$0xf]
    %v66 = vld [vmem:[%s1 + $0xd0] sm:$0xf]
    %v67 = vld [vmem:[%s1 + $0xd4] sm:$0xf]
    %v68 = vld [vmem:[%s1 + $0xd8] sm:$0xf]
    %v69 = vld [vmem:[%s1 + $0xdc] sm:$0xf]
    %v70 = vld [vmem:[%s1 + $0xe0] sm:$0xf]
    %v71 = vld [vmem:[%s1 + $0xe4] sm:$0xf]
    %v72 = vld [vmem:[%s1 + $0xe8] sm:$0xf]
    %v73 = vld [vmem:[%s1 + $0xec] sm:$0xf]
    %v74 = vld [vmem:[%s1 + $0xf0] sm:$0xf]
    %v75 = vld [vmem:[%s1 + $0xf4] sm:$0xf]
    %v76 = vld [vmem:[%s1 + $0xf8] sm:$0xf]
    %v77 = vld [vmem:[%s1 + $0xfc] sm:$0xf]
    %v80 = vunpack.c.l.s4 1966171168
    %v81 = vunpack.c.0.s8 %v80
    %v82 = vlaneseq
    %v83 = vshrl.u32 %v82, 7
    %v84 = vsub.s32 %v81, %v83
    %v85 = vrot.slane %v13, %v84
    %v86 = vcombine.high %v85, %v85
    %v88 = vunpack.c.l.s4 1966171168
    %v89 = vunpack.c.0.s8 %v88
    %v90 = vlaneseq
    %v91 = vshrl.u32 %v90, 7
    %v92 = vsub.s32 %v89, %v91
    %v93 = vrot.slane %v85, %v92
    %v95 = vunpack.c.l.s4 1966171168
    %v96 = vunpack.c.0.s8 %v95
    %v97 = vlaneseq
    %v98 = vshrl.u32 %v97, 7
    %v99 = vsub.s32 %v96, %v98
    %v100 = vrot.slane %v86, %v99
    %v101 = vcombine.high %v93, %v93
    %v102 = vcombine.high %v100, %v100
    %v171 = vunpack.c.l.b16 %v14
    %v172 = vunpack.c.l.b16 %v15
    %v173 = vunpack.c.l.b16 %v16
    %v174 = vunpack.c.l.b16 %v17
    %v175 = vunpack.c.l.b16 %v18
    %v176 = vunpack.c.l.b16 %v19
    %v177 = vunpack.c.l.b16 %v20
    %v178 = vunpack.c.l.b16 %v21
    %v179 = vunpack.c.l.b16 %v22
    %v180 = vunpack.c.l.b16 %v23
    %v181 = vunpack.c.l.b16 %v24
    %v182 = vunpack.c.l.b16 %v25
    %v183 = vunpack.c.l.b16 %v26
    %v184 = vunpack.c.l.b16 %v27
    %v185 = vunpack.c.l.b16 %v28
    %v186 = vunpack.c.l.b16 %v29
    %v187 = vunpack.c.l.b16 %v30
    %v188 = vunpack.c.l.b16 %v31
    %v189 = vunpack.c.l.b16 %v32
    %v190 = vunpack.c.l.b16 %v33
    %v191 = vunpack.c.l.b16 %v34
    %v192 = vunpack.c.l.b16 %v35
    %v193 = vunpack.c.l.b16 %v36
    %v194 = vunpack.c.l.b16 %v37
    %v195 = vunpack.c.l.b16 %v38
    %v196 = vunpack.c.l.b16 %v39
    %v197 = vunpack.c.l.b16 %v40
    %v198 = vunpack.c.l.b16 %v41
    %v199 = vunpack.c.l.b16 %v42
    %v200 = vunpack.c.l.b16 %v43
    %v201 = vunpack.c.l.b16 %v44
    %v202 = vunpack.c.l.b16 %v45
    %v203 = vunpack.c.l.b16 %v46
    %v204 = vunpack.c.l.b16 %v47
    %v205 = vunpack.c.l.b16 %v48
    %v206 = vunpack.c.l.b16 %v49
    %v207 = vunpack.c.l.b16 %v50
    %v208 = vunpack.c.l.b16 %v51
    %v209 = vunpack.c.l.b16 %v52
    %v210 = vunpack.c.l.b16 %v53
    %v211 = vunpack.c.l.b16 %v54
    %v212 = vunpack.c.l.b16 %v55
    %v213 = vunpack.c.l.b16 %v56
    %v214 = vunpack.c.l.b16 %v57
    %v215 = vunpack.c.l.b16 %v58
    %v216 = vunpack.c.l.b16 %v59
    %v217 = vunpack.c.l.b16 %v60
    %v218 = vunpack.c.l.b16 %v61
    %v219 = vunpack.c.l.b16 %v62
    %v220 = vunpack.c.l.b16 %v63
    %v221 = vunpack.c.l.b16 %v64
    %v222 = vunpack.c.l.b16 %v65
    %v223 = vunpack.c.l.b16 %v66
    %v224 = vunpack.c.l.b16 %v67
    %v225 = vunpack.c.l.b16 %v68
    %v226 = vunpack.c.l.b16 %v69
    %v227 = vunpack.c.l.b16 %v70
    %v228 = vunpack.c.l.b16 %v71
    %v229 = vunpack.c.l.b16 %v72
    %v230 = vunpack.c.l.b16 %v73
    %v231 = vunpack.c.l.b16 %v74
    %v232 = vunpack.c.l.b16 %v75
    %v233 = vunpack.c.l.b16 %v76
    %v234 = vunpack.c.l.b16 %v77
    %v235 = vpack.c.b16 %v172, %v171
    %v236 = vpack.c.b16 %v174, %v173
    %v237 = vpack.c.b16 %v176, %v175
    %v238 = vpack.c.b16 %v178, %v177
    %v239 = vpack.c.b16 %v180, %v179
    %v240 = vpack.c.b16 %v182, %v181
    %v241 = vpack.c.b16 %v184, %v183
    %v242 = vpack.c.b16 %v186, %v185
    %v243 = vpack.c.b16 %v188, %v187
    %v244 = vpack.c.b16 %v190, %v189
    %v245 = vpack.c.b16 %v192, %v191
    %v246 = vpack.c.b16 %v194, %v193
    %v247 = vpack.c.b16 %v196, %v195
    %v248 = vpack.c.b16 %v198, %v197
    %v249 = vpack.c.b16 %v200, %v199
    %v250 = vpack.c.b16 %v202, %v201
    %v251 = vpack.c.b16 %v204, %v203
    %v252 = vpack.c.b16 %v206, %v205
    %v253 = vpack.c.b16 %v208, %v207
    %v254 = vpack.c.b16 %v210, %v209
    %v255 = vpack.c.b16 %v212, %v211
    %v256 = vpack.c.b16 %v214, %v213
    %v257 = vpack.c.b16 %v216, %v215
    %v258 = vpack.c.b16 %v218, %v217
    %v259 = vpack.c.b16 %v220, %v219
    %v260 = vpack.c.b16 %v222, %v221
    %v261 = vpack.c.b16 %v224, %v223
    %v262 = vpack.c.b16 %v226, %v225
    %v263 = vpack.c.b16 %v228, %v227
    %v264 = vpack.c.b16 %v230, %v229
    %v265 = vpack.c.b16 %v232, %v231
    %v266 = vpack.c.b16 %v234, %v233
    %299 = vmatprep.subr.bf16.mxu0 0
    %300 = vmatpush1.bf16.msra.mxu0 %v235
    %301 = vmatprep.subr.bf16.mxu0 0
    %302 = vmatpush1.bf16.msra.mxu0 %v236
    %303 = vmatprep.subr.bf16.mxu0 0
    %304 = vmatpush1.bf16.msra.mxu0 %v237
    %305 = vmatprep.subr.bf16.mxu0 0
    %306 = vmatpush1.bf16.msra.mxu0 %v238
    %307 = vmatprep.subr.bf16.mxu0 0
    %308 = vmatpush1.bf16.msra.mxu0 %v239
    %309 = vmatprep.subr.bf16.mxu0 0
    %310 = vmatpush1.bf16.msra.mxu0 %v240
    %311 = vmatprep.subr.bf16.mxu0 0
    %312 = vmatpush1.bf16.msra.mxu0 %v241
    %313 = vmatprep.subr.bf16.mxu0 0
    %314 = vmatpush1.bf16.msra.mxu0 %v242
    %315 = vmatprep.subr.bf16.mxu0 0
    %316 = vmatpush1.bf16.msra.mxu0 %v243
    %317 = vmatprep.subr.bf16.mxu0 0
    %318 = vmatpush1.bf16.msra.mxu0 %v244
    %319 = vmatprep.subr.bf16.mxu0 0
    %320 = vmatpush1.bf16.msra.mxu0 %v245
    %321 = vmatprep.subr.bf16.mxu0 0
    %322 = vmatpush1.bf16.msra.mxu0 %v246
    %323 = vmatprep.subr.bf16.mxu0 0
    %324 = vmatpush1.bf16.msra.mxu0 %v247
    %325 = vmatprep.subr.bf16.mxu0 0
    %326 = vmatpush1.bf16.msra.mxu0 %v248
    %327 = vmatprep.subr.bf16.mxu0 0
    %328 = vmatpush1.bf16.msra.mxu0 %v249
    %329 = vmatprep.subr.bf16.mxu0 0
    %330 = vmatpush1.bf16.msra.mxu0 %v250
    %331 = vmatprep.mubr.bf16.mxu0 %v100
    %332 = vmatmul.mubr.bf16.gmra.mrb[0].mxu0 %v93
    %v333 = vpop.f32.mrb[0].mxu0
    %v334 = vadd.f32 0.0, %v333
    %v335 = vpop.f32.mrb[0].mxu0
    %v336 = vpop.f32.mrb[0].mxu0
    %v337 = vpop.f32.mrb[0].mxu0
    %338 = vdwg.mxu0
    %339 = vmatprep.subr.bf16.mxu0 0
    %340 = vmatpush1.bf16.msra.mxu0 %v251
    %341 = vmatprep.subr.bf16.mxu0 0
    %342 = vmatpush1.bf16.msra.mxu0 %v252
    %343 = vmatprep.subr.bf16.mxu0 0
    %344 = vmatpush1.bf16.msra.mxu0 %v253
    %345 = vmatprep.subr.bf16.mxu0 0
    %346 = vmatpush1.bf16.msra.mxu0 %v254
    %347 = vmatprep.subr.bf16.mxu0 0
    %348 = vmatpush1.bf16.msra.mxu0 %v255
    %349 = vmatprep.subr.bf16.mxu0 0
    %350 = vmatpush1.bf16.msra.mxu0 %v256
    %351 = vmatprep.subr.bf16.mxu0 0
    %352 = vmatpush1.bf16.msra.mxu0 %v257
    %353 = vmatprep.subr.bf16.mxu0 0
    %354 = vmatpush1.bf16.msra.mxu0 %v258
    %355 = vmatprep.subr.bf16.mxu0 0
    %356 = vmatpush1.bf16.msra.mxu0 %v259
    %357 = vmatprep.subr.bf16.mxu0 0
    %358 = vmatpush1.bf16.msra.mxu0 %v260
    %359 = vmatprep.subr.bf16.mxu0 0
    %360 = vmatpush1.bf16.msra.mxu0 %v261
    %361 = vmatprep.subr.bf16.mxu0 0
    %362 = vmatpush1.bf16.msra.mxu0 %v262
    %363 = vmatprep.subr.bf16.mxu0 0
    %364 = vmatpush1.bf16.msra.mxu0 %v263
    %365 = vmatprep.subr.bf16.mxu0 0
    %366 = vmatpush1.bf16.msra.mxu0 %v264
    %367 = vmatprep.subr.bf16.mxu0 0
    %368 = vmatpush1.bf16.msra.mxu0 %v265
    %369 = vmatprep.subr.bf16.mxu0 0
    %370 = vmatpush1.bf16.msra.mxu0 %v266
    %371 = vmatprep.mubr.bf16.mxu0 %v102
    %372 = vmatmul.mubr.bf16.gmra.mrb[0].mxu0 %v101
    %v373 = vpop.f32.mrb[0].mxu0
    %v374 = vadd.f32 %v334, %v373
    %v375 = vpop.f32.mrb[0].mxu0
    %v376 = vpop.f32.mrb[0].mxu0
    %v377 = vpop.f32.mrb[0].mxu0
    %378 = vdwg.mxu0
    %vm379 = vcmask 58368
    %380 = vst.msk [vmem:[#allocation2] sm:$0x3] %vm379, %v374
    // Predicated region
    $region10: #{_lambda_.5} parent=1 // pred_check
      _
    $region11: #{_lambda_.5} parent=1 // pred_check_branch
      %382 = sbr.rel (0) target = $region13
    $region12: #{_lambda_.5} parent=1 // pred_region
      %s384 = ssub.s32 32, 32
      %385 = vsyncadd [#allocation3], %s384
      %s387 = sshll.u32 [#allocation2], 4
      %s388 = int_to_ptr.vmem [resolvable:$true] %s387
      %390 = dma.vmem_to_hbm [thread:$0]  %s388, 32, %s2, [#allocation3]
    $region13: #{_lambda_.5} parent=1 // pred_fallthru
      _
    // Predicated region
    $region14: #{_lambda_.5} parent=1 // pred_check
      _
    $region15: #{_lambda_.5} parent=1 // pred_check_branch
      %392 = sbr.rel (0) target = $region17
    $region16: #{_lambda_.5} parent=1 // pred_region
      %393 = dma.done [#allocation3], 32
    $region17: #{_lambda_.5} parent=1 // pred_fallthru
      _
    %394 = vsyncpa [#allocation3], 1

</llo_original>
